<compile_context>
chip_gen: v7x
topology: tpu7x:2x2x1
jax: 0.10.0
libtpu: 0.0.40
codegen_flags: <defaults>
</compile_context>

<pallas_src>
import functools

import numpy as np
import jax
import jax.numpy as jnp
from jax.experimental import pallas as pl
from jax.experimental.pallas import tpu as pltpu


def _lasm_kernel(x_ref, ww_ref, wT_ref, bT_ref, o_ref, *, M, N, Cin):
    # x_ref : (N*Cin, TP)   gathered neighbour features, point axis last
    # ww_ref: (N*M,  TP)    masked per-point neighbour->weight-bank coefficients
    # wT_ref: (Cout, M*Cin) weight bank, wT[o, m*Cin + i] = W[m, o, i]
    # bT_ref: (Cout, TP)    per-point bias, point axis last
    # o_ref : (Cout, TP)    output tile, point axis last (lane-dense store)
    x = x_ref[...].astype(jnp.float32)
    ww = ww_ref[...].astype(jnp.float32)
    wT = wT_ref[...].astype(jnp.float32)

    # fuse_T[m*Cin + i, r] = sum_n ww[n*M + m, r] * x[n*Cin + i, r]
    # N, M are tiny and static -> fully unrolled VPU multiply-adds on
    # lane-dense (Cin, TP) slabs.
    fuse_rows = []
    for m in range(M):
        acc = ww[m:m + 1, :] * x[0:Cin, :]
        for n in range(1, N):
            acc = acc + (ww[n * M + m:n * M + m + 1, :]
                         * x[n * Cin:(n + 1) * Cin, :])
        fuse_rows.append(acc)                        # (Cin, TP)
    fuse_T = jnp.concatenate(fuse_rows, axis=0)      # (M*Cin, TP)

    # Single MXU matmul over the collapsed (M, Cin) contraction axis.
    out = jnp.dot(wT, fuse_T, preferred_element_type=jnp.float32)   # (Cout, TP)
    out = out + bT_ref[...].astype(jnp.float32)

    # ELU (alpha = 1.0); is_final_layer == False in the default config.
    out = jnp.where(out > 0, out, jnp.exp(jnp.minimum(out, 0.0)) - 1.0)
    o_ref[...] = out.astype(o_ref.dtype)


def lasm_conv_ssw(in_pc, raw_w_weights, weights, bias, neighbor_id_lstlst,
                  in_pn, *, point_tile=None, vmem_limit_bytes=48 * 1024 * 1024):
    """Pallas-backed forward of LASMConvssw (default flags)."""
    B, _, Cin = in_pc.shape
    out_pn, N = neighbor_id_lstlst.shape
    M = weights.shape[0]
    Cout = weights.shape[1] // Cin

    # ----- JAX glue: masking, padding, neighbour gather, layout transposes -----
    pc_mask = jnp.ones((in_pn + 1,), jnp.float32).at[in_pn].set(0.0)
    neighbor_mask = pc_mask[neighbor_id_lstlst]                     # (out_pn, N)
    w_weights = raw_w_weights * neighbor_mask[:, :, None]           # (out_pn, N, M)

    in_pc_pad = jnp.concatenate(
        [in_pc, jnp.zeros((B, 1, Cin), in_pc.dtype)], axis=1)       # (B, in_pn+1, Cin)
    # TODO(synk): fuse this gather into the kernel (scalar-prefetched neighbour
    # ids + pl.ANY input) to avoid the N x HBM blow-up of the activations.
    x_nb = in_pc_pad[:, neighbor_id_lstlst]                         # (B, out_pn, N, Cin)

    # Lane-dense, point-axis-last layouts (layout plumbing in the wrapper).
    x_T = jnp.transpose(x_nb, (0, 2, 3, 1)).reshape(B, N * Cin, out_pn)
    x_T = x_T.astype(jnp.float32)                                   # (B, N*Cin, P)
    ww_T = jnp.transpose(w_weights, (1, 2, 0)).reshape(N * M, out_pn)
    ww_T = ww_T.astype(jnp.float32)                                 # (N*M, P)
    W_T = jnp.transpose(weights.reshape(M, Cout, Cin), (1, 0, 2))
    W_T = W_T.reshape(Cout, M * Cin).astype(jnp.float32)            # (Cout, M*Cin)
    bias_pp = jnp.broadcast_to(bias, (out_pn, Cout))
    b_T = jnp.transpose(bias_pp, (1, 0)).astype(jnp.float32)        # (Cout, P)

    # ----- point tiling: as large as VMEM comfortably allows, lane-aligned -----
    if point_tile is None:
        point_tile = out_pn
        for cand in (1024, 512, 256, 128):
            if out_pn % cand == 0:
                point_tile = cand
                break
    if out_pn % point_tile != 0 or (point_tile % 128 != 0
                                    and point_tile != out_pn):
        point_tile = out_pn
    grid = (B, out_pn // point_tile)

    kernel = functools.partial(_lasm_kernel, M=M, N=N, Cin=Cin)

    out_T = pl.pallas_call(
        kernel,
        out_shape=jax.ShapeDtypeStruct((B, Cout, out_pn), jnp.float32),
        grid_spec=pltpu.PrefetchScalarGridSpec(
            num_scalar_prefetch=0,
            grid=grid,
            in_specs=[
                # gathered neighbour features (per batch, per point tile)
                pl.BlockSpec((None, N * Cin, point_tile),
                             lambda b, p: (b, 0, p)),
                # per-point neighbour coefficients (shared across batch)
                pl.BlockSpec((N * M, point_tile), lambda b, p: (0, p)),
                # weight bank: constant block index -> fetched once, resident
                pl.BlockSpec((Cout, M * Cin), lambda b, p: (0, 0)),
                # per-point bias (shared across batch)
                pl.BlockSpec((Cout, point_tile), lambda b, p: (0, p)),
            ],
            out_specs=pl.BlockSpec((None, Cout, point_tile),
                                   lambda b, p: (b, 0, p)),
        ),
        compiler_params=pltpu.CompilerParams(
            dimension_semantics=("parallel", "parallel"),
            vmem_limit_bytes=vmem_limit_bytes),
    )(x_T, ww_T, W_T, b_T)

    return jnp.transpose(out_T, (0, 2, 1))                          # (B, P, Cout)


def lasm_conv_ssw_reference(in_pc, raw_w_weights, weights, bias,
                            neighbor_id_lstlst, in_pn):
    """Pure-JAX reference matching the PyTorch forward (default flags)."""
    B, _, Cin = in_pc.shape
    out_pn, N = neighbor_id_lstlst.shape
    M = weights.shape[0]
    Cout = weights.shape[1] // Cin

    pc_mask = jnp.ones((in_pn + 1,), jnp.float32).at[in_pn].set(0.0)
    mask = pc_mask[neighbor_id_lstlst]
    w_weights = raw_w_weights * mask[:, :, None]
    in_pc_pad = jnp.concatenate(
        [in_pc, jnp.zeros((B, 1, Cin), in_pc.dtype)], axis=1)
    in_nb = in_pc_pad[:, neighbor_id_lstlst]                        # (B,P,N,I)
    fuse = jnp.einsum('pnm,bpni->bpmi', w_weights, in_nb)
    Wn = weights.reshape(M, Cout, Cin)
    out_nb = jnp.einsum('moi,bpmi->bpmo', Wn, fuse)
    out = out_nb.sum(2) + jnp.broadcast_to(bias, (out_pn, Cout))
    return jnp.where(out > 0, out, jnp.exp(jnp.minimum(out, 0.0)) - 1.0)


if __name__ == "__main__":
    # ----- small, deterministic problem setup -----
    B = 2
    in_channel = 4
    out_channel = 8
    weight_num = 4
    in_pn = 16
    out_pn = 16
    max_neighbor = 6

    # Deterministic synthetic connection_info: (out_pn, 1 + 2*max_neighbor)
    rng = np.random.RandomState(0)
    conn = np.zeros((out_pn, 1 + 2 * max_neighbor), dtype=np.int64)
    for p in range(out_pn):
        k = rng.randint(1, max_neighbor + 1)
        conn[p, 0] = k
        ids = np.full((max_neighbor,), in_pn, dtype=np.int64)  # pad slot -> in_pn
        ids[:k] = rng.randint(0, in_pn, size=k)
        conn[p, 1::2] = ids          # neighbor ids
        conn[p, 2::2] = 1            # (unused) distances
    neighbor_id_lstlst = jnp.asarray(
        conn[:, 1:].reshape(out_pn, max_neighbor, 2)[:, :, 0], dtype=jnp.int32)

    # Deterministic parameters (module __init__ shapes)
    key = jax.random.PRNGKey(0)
    k1, k2, k3 = jax.random.split(key, 3)
    weights = jax.random.normal(k1, (weight_num, out_channel * in_channel),
                                dtype=jnp.float32)
    bias = jnp.zeros((out_pn, out_channel), dtype=jnp.float32)  # b_Perpt_bias=True

    # Inputs
    in_pc = jax.random.normal(k2, (B, in_pn, in_channel), dtype=jnp.float32)
    raw_w_weights = jax.random.normal(
        k3, (out_pn, max_neighbor, weight_num), dtype=jnp.float32)

    out = lasm_conv_ssw(in_pc, raw_w_weights, weights, bias,
                        neighbor_id_lstlst, in_pn)
    out = jax.block_until_ready(out)

    ref = lasm_conv_ssw_reference(in_pc, raw_w_weights, weights, bias,
                                  neighbor_id_lstlst, in_pn)
    ref = jax.block_until_ready(ref)

    assert out.shape == (B, out_pn, out_channel)
    np.testing.assert_allclose(np.asarray(out), np.asarray(ref),
                               rtol=1e-5, atol=1e-5)
    print("KERNEL_OK")
</pallas_src>

<mosaic_0001>
module attributes {stable_mosaic.version = 11 : i64} {
  func.func @_lasm_kernel(%arg0: i32, %arg1: i32, %arg2: memref<1x24x16xf32, #tpu.memory_space<vmem>>, %arg3: memref<24x16xf32, #tpu.memory_space<vmem>>, %arg4: memref<8x16xf32, #tpu.memory_space<vmem>>, %arg5: memref<8x16xf32, #tpu.memory_space<vmem>>, %arg6: memref<1x8x16xf32, #tpu.memory_space<vmem>>) attributes {dimension_semantics = [#tpu.dimension_semantics<parallel>, #tpu.dimension_semantics<parallel>], iteration_bounds = array<i64: 2, 1>, scalar_prefetch = 0 : i64, scratch_operands = 0 : i64, tpu.core_type = #tpu.core_type<tc>, window_params = [{transform_indices = @transform_0, window_bounds = array<i64: 1, 24, 16>}, {transform_indices = @transform_1, window_bounds = array<i64: 24, 16>}, {pipeline_mode = #tpu.pipeline_mode<synchronous>, transform_indices = @transform_2, window_bounds = array<i64: 8, 16>}, {transform_indices = @transform_3, window_bounds = array<i64: 8, 16>}, {transform_indices = @transform_4, window_bounds = array<i64: 1, 8, 16>}]} {
    %c0 = arith.constant 0 : index
    %c0_0 = arith.constant 0 : index
    %c0_1 = arith.constant 0 : index
    %0 = vector.load %arg2[%c0, %c0_0, %c0_1] : memref<1x24x16xf32, #tpu.memory_space<vmem>>, vector<1x24x16xf32>
    %1 = vector.shape_cast %0 : vector<1x24x16xf32> to vector<24x16xf32>
    %c0_2 = arith.constant 0 : index
    %c0_3 = arith.constant 0 : index
    %2 = vector.load %arg3[%c0_2, %c0_3] : memref<24x16xf32, #tpu.memory_space<vmem>>, vector<24x16xf32>
    %c0_4 = arith.constant 0 : index
    %c0_5 = arith.constant 0 : index
    %3 = vector.load %arg4[%c0_4, %c0_5] : memref<8x16xf32, #tpu.memory_space<vmem>>, vector<8x16xf32>
    %4 = vector.extract_strided_slice %2 {offsets = [0, 0], sizes = [1, 16], strides = [1, 1]} : vector<24x16xf32> to vector<1x16xf32>
    %5 = vector.extract_strided_slice %1 {offsets = [0, 0], sizes = [4, 16], strides = [1, 1]} : vector<24x16xf32> to vector<4x16xf32>
    %6 = vector.broadcast %4 : vector<1x16xf32> to vector<4x16xf32>
    %7 = arith.mulf %6, %5 : vector<4x16xf32>
    %8 = vector.extract_strided_slice %2 {offsets = [4, 0], sizes = [1, 16], strides = [1, 1]} : vector<24x16xf32> to vector<1x16xf32>
    %9 = vector.extract_strided_slice %1 {offsets = [4, 0], sizes = [4, 16], strides = [1, 1]} : vector<24x16xf32> to vector<4x16xf32>
    %10 = vector.broadcast %8 : vector<1x16xf32> to vector<4x16xf32>
    %11 = arith.mulf %10, %9 : vector<4x16xf32>
    %12 = arith.addf %7, %11 : vector<4x16xf32>
    %13 = vector.extract_strided_slice %2 {offsets = [8, 0], sizes = [1, 16], strides = [1, 1]} : vector<24x16xf32> to vector<1x16xf32>
    %14 = vector.extract_strided_slice %1 {offsets = [8, 0], sizes = [4, 16], strides = [1, 1]} : vector<24x16xf32> to vector<4x16xf32>
    %15 = vector.broadcast %13 : vector<1x16xf32> to vector<4x16xf32>
    %16 = arith.mulf %15, %14 : vector<4x16xf32>
    %17 = arith.addf %12, %16 : vector<4x16xf32>
    %18 = vector.extract_strided_slice %2 {offsets = [12, 0], sizes = [1, 16], strides = [1, 1]} : vector<24x16xf32> to vector<1x16xf32>
    %19 = vector.extract_strided_slice %1 {offsets = [12, 0], sizes = [4, 16], strides = [1, 1]} : vector<24x16xf32> to vector<4x16xf32>
    %20 = vector.broadcast %18 : vector<1x16xf32> to vector<4x16xf32>
    %21 = arith.mulf %20, %19 : vector<4x16xf32>
    %22 = arith.addf %17, %21 : vector<4x16xf32>
    %23 = vector.extract_strided_slice %2 {offsets = [16, 0], sizes = [1, 16], strides = [1, 1]} : vector<24x16xf32> to vector<1x16xf32>
    %24 = vector.extract_strided_slice %1 {offsets = [16, 0], sizes = [4, 16], strides = [1, 1]} : vector<24x16xf32> to vector<4x16xf32>
    %25 = vector.broadcast %23 : vector<1x16xf32> to vector<4x16xf32>
    %26 = arith.mulf %25, %24 : vector<4x16xf32>
    %27 = arith.addf %22, %26 : vector<4x16xf32>
    %28 = vector.extract_strided_slice %2 {offsets = [20, 0], sizes = [1, 16], strides = [1, 1]} : vector<24x16xf32> to vector<1x16xf32>
    %29 = vector.extract_strided_slice %1 {offsets = [20, 0], sizes = [4, 16], strides = [1, 1]} : vector<24x16xf32> to vector<4x16xf32>
    %30 = vector.broadcast %28 : vector<1x16xf32> to vector<4x16xf32>
    %31 = arith.mulf %30, %29 : vector<4x16xf32>
    %32 = arith.addf %27, %31 : vector<4x16xf32>
    %33 = vector.extract_strided_slice %2 {offsets = [1, 0], sizes = [1, 16], strides = [1, 1]} : vector<24x16xf32> to vector<1x16xf32>
    %34 = vector.extract_strided_slice %1 {offsets = [0, 0], sizes = [4, 16], strides = [1, 1]} : vector<24x16xf32> to vector<4x16xf32>
    %35 = vector.broadcast %33 : vector<1x16xf32> to vector<4x16xf32>
    %36 = arith.mulf %35, %34 : vector<4x16xf32>
    %37 = vector.extract_strided_slice %2 {offsets = [5, 0], sizes = [1, 16], strides = [1, 1]} : vector<24x16xf32> to vector<1x16xf32>
    %38 = vector.extract_strided_slice %1 {offsets = [4, 0], sizes = [4, 16], strides = [1, 1]} : vector<24x16xf32> to vector<4x16xf32>
    %39 = vector.broadcast %37 : vector<1x16xf32> to vector<4x16xf32>
    %40 = arith.mulf %39, %38 : vector<4x16xf32>
    %41 = arith.addf %36, %40 : vector<4x16xf32>
    %42 = vector.extract_strided_slice %2 {offsets = [9, 0], sizes = [1, 16], strides = [1, 1]} : vector<24x16xf32> to vector<1x16xf32>
    %43 = vector.extract_strided_slice %1 {offsets = [8, 0], sizes = [4, 16], strides = [1, 1]} : vector<24x16xf32> to vector<4x16xf32>
    %44 = vector.broadcast %42 : vector<1x16xf32> to vector<4x16xf32>
    %45 = arith.mulf %44, %43 : vector<4x16xf32>
    %46 = arith.addf %41, %45 : vector<4x16xf32>
    %47 = vector.extract_strided_slice %2 {offsets = [13, 0], sizes = [1, 16], strides = [1, 1]} : vector<24x16xf32> to vector<1x16xf32>
    %48 = vector.extract_strided_slice %1 {offsets = [12, 0], sizes = [4, 16], strides = [1, 1]} : vector<24x16xf32> to vector<4x16xf32>
    %49 = vector.broadcast %47 : vector<1x16xf32> to vector<4x16xf32>
    %50 = arith.mulf %49, %48 : vector<4x16xf32>
    %51 = arith.addf %46, %50 : vector<4x16xf32>
    %52 = vector.extract_strided_slice %2 {offsets = [17, 0], sizes = [1, 16], strides = [1, 1]} : vector<24x16xf32> to vector<1x16xf32>
    %53 = vector.extract_strided_slice %1 {offsets = [16, 0], sizes = [4, 16], strides = [1, 1]} : vector<24x16xf32> to vector<4x16xf32>
    %54 = vector.broadcast %52 : vector<1x16xf32> to vector<4x16xf32>
    %55 = arith.mulf %54, %53 : vector<4x16xf32>
    %56 = arith.addf %51, %55 : vector<4x16xf32>
    %57 = vector.extract_strided_slice %2 {offsets = [21, 0], sizes = [1, 16], strides = [1, 1]} : vector<24x16xf32> to vector<1x16xf32>
    %58 = vector.extract_strided_slice %1 {offsets = [20, 0], sizes = [4, 16], strides = [1, 1]} : vector<24x16xf32> to vector<4x16xf32>
    %59 = vector.broadcast %57 : vector<1x16xf32> to vector<4x16xf32>
    %60 = arith.mulf %59, %58 : vector<4x16xf32>
    %61 = arith.addf %56, %60 : vector<4x16xf32>
    %62 = vector.extract_strided_slice %2 {offsets = [2, 0], sizes = [1, 16], strides = [1, 1]} : vector<24x16xf32> to vector<1x16xf32>
    %63 = vector.extract_strided_slice %1 {offsets = [0, 0], sizes = [4, 16], strides = [1, 1]} : vector<24x16xf32> to vector<4x16xf32>
    %64 = vector.broadcast %62 : vector<1x16xf32> to vector<4x16xf32>
    %65 = arith.mulf %64, %63 : vector<4x16xf32>
    %66 = vector.extract_strided_slice %2 {offsets = [6, 0], sizes = [1, 16], strides = [1, 1]} : vector<24x16xf32> to vector<1x16xf32>
    %67 = vector.extract_strided_slice %1 {offsets = [4, 0], sizes = [4, 16], strides = [1, 1]} : vector<24x16xf32> to vector<4x16xf32>
    %68 = vector.broadcast %66 : vector<1x16xf32> to vector<4x16xf32>
    %69 = arith.mulf %68, %67 : vector<4x16xf32>
    %70 = arith.addf %65, %69 : vector<4x16xf32>
    %71 = vector.extract_strided_slice %2 {offsets = [10, 0], sizes = [1, 16], strides = [1, 1]} : vector<24x16xf32> to vector<1x16xf32>
    %72 = vector.extract_strided_slice %1 {offsets = [8, 0], sizes = [4, 16], strides = [1, 1]} : vector<24x16xf32> to vector<4x16xf32>
    %73 = vector.broadcast %71 : vector<1x16xf32> to vector<4x16xf32>
    %74 = arith.mulf %73, %72 : vector<4x16xf32>
    %75 = arith.addf %70, %74 : vector<4x16xf32>
    %76 = vector.extract_strided_slice %2 {offsets = [14, 0], sizes = [1, 16], strides = [1, 1]} : vector<24x16xf32> to vector<1x16xf32>
    %77 = vector.extract_strided_slice %1 {offsets = [12, 0], sizes = [4, 16], strides = [1, 1]} : vector<24x16xf32> to vector<4x16xf32>
    %78 = vector.broadcast %76 : vector<1x16xf32> to vector<4x16xf32>
    %79 = arith.mulf %78, %77 : vector<4x16xf32>
    %80 = arith.addf %75, %79 : vector<4x16xf32>
    %81 = vector.extract_strided_slice %2 {offsets = [18, 0], sizes = [1, 16], strides = [1, 1]} : vector<24x16xf32> to vector<1x16xf32>
    %82 = vector.extract_strided_slice %1 {offsets = [16, 0], sizes = [4, 16], strides = [1, 1]} : vector<24x16xf32> to vector<4x16xf32>
    %83 = vector.broadcast %81 : vector<1x16xf32> to vector<4x16xf32>
    %84 = arith.mulf %83, %82 : vector<4x16xf32>
    %85 = arith.addf %80, %84 : vector<4x16xf32>
    %86 = vector.extract_strided_slice %2 {offsets = [22, 0], sizes = [1, 16], strides = [1, 1]} : vector<24x16xf32> to vector<1x16xf32>
    %87 = vector.extract_strided_slice %1 {offsets = [20, 0], sizes = [4, 16], strides = [1, 1]} : vector<24x16xf32> to vector<4x16xf32>
    %88 = vector.broadcast %86 : vector<1x16xf32> to vector<4x16xf32>
    %89 = arith.mulf %88, %87 : vector<4x16xf32>
    %90 = arith.addf %85, %89 : vector<4x16xf32>
    %91 = vector.extract_strided_slice %2 {offsets = [3, 0], sizes = [1, 16], strides = [1, 1]} : vector<24x16xf32> to vector<1x16xf32>
    %92 = vector.extract_strided_slice %1 {offsets = [0, 0], sizes = [4, 16], strides = [1, 1]} : vector<24x16xf32> to vector<4x16xf32>
    %93 = vector.broadcast %91 : vector<1x16xf32> to vector<4x16xf32>
    %94 = arith.mulf %93, %92 : vector<4x16xf32>
    %95 = vector.extract_strided_slice %2 {offsets = [7, 0], sizes = [1, 16], strides = [1, 1]} : vector<24x16xf32> to vector<1x16xf32>
    %96 = vector.extract_strided_slice %1 {offsets = [4, 0], sizes = [4, 16], strides = [1, 1]} : vector<24x16xf32> to vector<4x16xf32>
    %97 = vector.broadcast %95 : vector<1x16xf32> to vector<4x16xf32>
    %98 = arith.mulf %97, %96 : vector<4x16xf32>
    %99 = arith.addf %94, %98 : vector<4x16xf32>
    %100 = vector.extract_strided_slice %2 {offsets = [11, 0], sizes = [1, 16], strides = [1, 1]} : vector<24x16xf32> to vector<1x16xf32>
    %101 = vector.extract_strided_slice %1 {offsets = [8, 0], sizes = [4, 16], strides = [1, 1]} : vector<24x16xf32> to vector<4x16xf32>
    %102 = vector.broadcast %100 : vector<1x16xf32> to vector<4x16xf32>
    %103 = arith.mulf %102, %101 : vector<4x16xf32>
    %104 = arith.addf %99, %103 : vector<4x16xf32>
    %105 = vector.extract_strided_slice %2 {offsets = [15, 0], sizes = [1, 16], strides = [1, 1]} : vector<24x16xf32> to vector<1x16xf32>
    %106 = vector.extract_strided_slice %1 {offsets = [12, 0], sizes = [4, 16], strides = [1, 1]} : vector<24x16xf32> to vector<4x16xf32>
    %107 = vector.broadcast %105 : vector<1x16xf32> to vector<4x16xf32>
    %108 = arith.mulf %107, %106 : vector<4x16xf32>
    %109 = arith.addf %104, %108 : vector<4x16xf32>
    %110 = vector.extract_strided_slice %2 {offsets = [19, 0], sizes = [1, 16], strides = [1, 1]} : vector<24x16xf32> to vector<1x16xf32>
    %111 = vector.extract_strided_slice %1 {offsets = [16, 0], sizes = [4, 16], strides = [1, 1]} : vector<24x16xf32> to vector<4x16xf32>
    %112 = vector.broadcast %110 : vector<1x16xf32> to vector<4x16xf32>
    %113 = arith.mulf %112, %111 : vector<4x16xf32>
    %114 = arith.addf %109, %113 : vector<4x16xf32>
    %115 = vector.extract_strided_slice %2 {offsets = [23, 0], sizes = [1, 16], strides = [1, 1]} : vector<24x16xf32> to vector<1x16xf32>
    %116 = vector.extract_strided_slice %1 {offsets = [20, 0], sizes = [4, 16], strides = [1, 1]} : vector<24x16xf32> to vector<4x16xf32>
    %117 = vector.broadcast %115 : vector<1x16xf32> to vector<4x16xf32>
    %118 = arith.mulf %117, %116 : vector<4x16xf32>
    %119 = arith.addf %114, %118 : vector<4x16xf32>
    %120 = tpu.concatenate %32, %61, %90, %119 in 0 : vector<4x16xf32>, vector<4x16xf32>, vector<4x16xf32>, vector<4x16xf32> -> vector<16x16xf32>
    %cst = arith.constant dense<0.000000e+00> : vector<8x16xf32>
    %121 = tpu.matmul %3, %120, %cst {dimension_numbers = #tpu.dot_dimension_numbers<[1], [0], [0], [1], [0, 0, 1, 1], [], []>} : vector<8x16xf32>, vector<16x16xf32>, vector<8x16xf32> -> vector<8x16xf32>
    %c0_6 = arith.constant 0 : index
    %c0_7 = arith.constant 0 : index
    %122 = vector.load %arg5[%c0_6, %c0_7] : memref<8x16xf32, #tpu.memory_space<vmem>>, vector<8x16xf32>
    %123 = arith.addf %121, %122 : vector<8x16xf32>
    %cst_8 = arith.constant 0.000000e+00 : f32
    %124 = vector.broadcast %cst_8 : f32 to vector<8x16xf32>
    %125 = arith.cmpf ogt, %123, %124 : vector<8x16xf32>
    %cst_9 = arith.constant 0.000000e+00 : f32
    %126 = vector.broadcast %cst_9 : f32 to vector<8x16xf32>
    %127 = arith.minimumf %123, %126 : vector<8x16xf32>
    %128 = math.exp %127 : vector<8x16xf32>
    %cst_10 = arith.constant 1.000000e+00 : f32
    %129 = vector.broadcast %cst_10 : f32 to vector<8x16xf32>
    %130 = arith.subf %128, %129 : vector<8x16xf32>
    %131 = arith.select %125, %123, %130 : vector<8x16xi1>, vector<8x16xf32>
    %c0_11 = arith.constant 0 : index
    %c0_12 = arith.constant 0 : index
    %c0_13 = arith.constant 0 : index
    %132 = vector.load %arg6[%c0_11, %c0_12, %c0_13] : memref<1x8x16xf32, #tpu.memory_space<vmem>>, vector<1x8x16xf32>
    %133 = vector.shape_cast %132 : vector<1x8x16xf32> to vector<8x16xf32>
    %134 = vector.shape_cast %131 : vector<8x16xf32> to vector<1x8x16xf32>
    tpu.vector_store %arg6[%c0_11, %c0_12, %c0_13], %134 {strides = array<i32>} : memref<1x8x16xf32, #tpu.memory_space<vmem>>, vector<1x8x16xf32>,
    return
  }
  func.func @transform_0(%arg0: i32, %arg1: i32) -> (i32, i32, i32) {
    %c0_i32 = arith.constant 0 : i32
    %c0_i32_0 = arith.constant 0 : i32
    return %arg0, %c0_i32, %arg1 : i32, i32, i32
  }
  func.func @transform_1(%arg0: i32, %arg1: i32) -> (i32, i32) {
    %c0_i32 = arith.constant 0 : i32
    %c0_i32_0 = arith.constant 0 : i32
    return %c0_i32, %arg1 : i32, i32
  }
  func.func @transform_2(%arg0: i32, %arg1: i32) -> (i32, i32) {
    %c0_i32 = arith.constant 0 : i32
    %c0_i32_0 = arith.constant 0 : i32
    %c0_i32_1 = arith.constant 0 : i32
    return %c0_i32, %c0_i32_0 : i32, i32
  }
  func.func @transform_3(%arg0: i32, %arg1: i32) -> (i32, i32) {
    %c0_i32 = arith.constant 0 : i32
    %c0_i32_0 = arith.constant 0 : i32
    return %c0_i32, %arg1 : i32, i32
  }
  func.func @transform_4(%arg0: i32, %arg1: i32) -> (i32, i32, i32) {
    %c0_i32 = arith.constant 0 : i32
    %c0_i32_0 = arith.constant 0 : i32
    return %arg0, %c0_i32, %arg1 : i32, i32, i32
  }
}

</mosaic_0001>

<llo_original>
// kernel: tpu_custom_call.1
$region0: #{tpu_custom_call.1}
  #allocation0 [shape = 'u32[]', space=smem, size = 0x4, offset = 0x4, fixed_abs, tag = 'smem constant byte address 0x4 - core index']
  #allocation1 [shape = 'u32[144,128]{1,0:T(1,128)}', space=vmem, size = 0x12000, scoped, tag = 'internal scratch']
  %s0 = inlined_call_operand.vmem [shape: f32[2,24,16], index: 0, kind: input, shape index: {}]
  %s1 = inlined_call_operand.vmem [shape: f32[24,16], index: 1, kind: input, shape index: {}]
  %s2 = inlined_call_operand.vmem [shape: f32[8,16], index: 2, kind: input, shape index: {}]
  %s3 = inlined_call_operand.vmem [shape: f32[8,16], index: 3, kind: input, shape index: {}]
  %s4 = inlined_call_operand.hbm [shape: f32[2,8,16], index: 4, kind: output, shape index: {}]
  %s5 = sld [smem:[#allocation0]]
  $region49: #{tpu_custom_call.1} parent=0
    _
  %s7 = ssub.s32 1, %s5
  %s8 = scalar_select 0, %s7, %s5
  $region1: #{tpu_custom_call.1} parent=0
    #allocation2 [shape = 'u8[8192]{0}', space=vmem, size = 0x2000, scoped, tag = 'output window, operand 0']
    #allocation3 [shape = 's32[2]{0}', space=sflag, size = 0x8, scoped, tag = 'scoped memory for tpu_custom_call.1']
    %9 = vsyncpa [#allocation3], 0
    %s10 = scalar_lea.sflag [#allocation3], 1
    %11 = vsyncpa %s10, 0
    loop: start=0, step=1, limit=4
    $region2: #{tpu_custom_call.1} parent=1 // loop_pre_header
      _
    $region3: #{tpu_custom_call.1} parent=1 // loop_header
      %s13 = sphi 0, %s17
      %p14 = scmp.ge.s32.totalorder %s13, 4
      %s20 = sphi 0, %s32
      %s21 = sphi 0, %s28
      %s22 = sphi 0, %s20
      %s23 = sphi 0, %s21
      %s24 = sphi 0, %s22
      %s25 = sphi 0, %s23
      %s37 = sphi 0, %s39
      %s40 = sphi 0, %s37
      %s41 = sphi 0, %s40
      %s57 = sphi 0, %s41
      %s63 = sphi 0, %s65
      %s66 = sphi 0, %s63
      %s67 = sphi 0, %s66
      %s83 = sphi 0, %s67
      %s87 = sphi 0, %s87
      %s89 = sphi 0, %s87
      %s90 = sphi 0, %s89
      %s104 = sphi 0, %s90
      %s110 = sphi 0, %s112
      %s113 = sphi 0, %s110
      %s114 = sphi 0, %s113
      %s130 = sphi 0, %s114
      %s138 = sphi 0, %s140
      %s141 = sphi 0, %s138
      %s142 = sphi 0, %s141
      %s158 = sphi 0, %s142
    $region4: #{tpu_custom_call.1} parent=1 // loop_header_branch
      %16 = sbr.rel (%p14) target = $region8
    $region5: #{tpu_custom_call.1} parent=1 // loop_body
      %s18 = ssub.s32 %s13, 1
      %s19 = ssub.s32 %s13, 2
      %s26 = sadd.s32 1, %s21
      %p27 = scmp.ge.s32.totalorder %s26, 1
      %s28 = scalar_select %p27, 0, %s26
      %s29 = sadd.s32 1, %s20
      %s30 = scalar_select %p27, %s29, %s20
      %p31 = scmp.ge.s32.totalorder %s30, 2
      %s32 = scalar_select %p31, 0, %s30
      %s33 = ssub.s32 %s20, %s32
      %s34 = ssub.s32 %s21, %s28
      %s35 = sor.u32 %s33, %s34
      %p36 = scmp.eq.s32.totalorder %s35, 0
      %s38 = sadd.s32 %s37, 1
      %s39 = scalar_select %p36, %s37, %s38
      %p42 = pneg %p36
      %p43 = scmp.eq.s32.totalorder %s13, 1
      %p44 = por %p42, %p43
      %p45 = scmp.ne.s32.totalorder %s37, %s40
      %p46 = scmp.eq.s32.totalorder %s13, 0
      %p47 = por %p45, %p46
      %p48 = scmp.ne.s32.totalorder %s37, %s40
      %p49 = scmp.eq.s32.totalorder %s18, 1
      %p50 = por %p48, %p49
      %p51 = scmp.ne.s32.totalorder %s40, %s41
      %p52 = scmp.eq.s32.totalorder %s18, 0
      %p53 = por %p51, %p52
      %p54 = scmp.ne.s32.totalorder %s40, %s41
      %p55 = scmp.eq.s32.totalorder %s19, 1
      %p56 = por %p54, %p55
      %p58 = scmp.ne.s32.totalorder %s41, %s57
      %p59 = scmp.eq.s32.totalorder %s19, 0
      %p60 = por %p58, %p59
      %s61 = ssub.s32 %s21, %s28
      %p62 = scmp.eq.s32.totalorder %s61, 0
      %s64 = sadd.s32 %s63, 1
      %s65 = scalar_select %p62, %s63, %s64
      %p68 = pneg %p62
      %p69 = scmp.eq.s32.totalorder %s13, 1
      %p70 = por %p68, %p69
      %p71 = scmp.ne.s32.totalorder %s63, %s66
      %p72 = scmp.eq.s32.totalorder %s13, 0
      %p73 = por %p71, %p72
      %p74 = scmp.ne.s32.totalorder %s63, %s66
      %p75 = scmp.eq.s32.totalorder %s18, 1
      %p76 = por %p74, %p75
      %p77 = scmp.ne.s32.totalorder %s66, %s67
      %p78 = scmp.eq.s32.totalorder %s18, 0
      %p79 = por %p77, %p78
      %p80 = scmp.ne.s32.totalorder %s66, %s67
      %p81 = scmp.eq.s32.totalorder %s19, 1
      %p82 = por %p80, %p81
      %p84 = scmp.ne.s32.totalorder %s67, %s83
      %p85 = scmp.eq.s32.totalorder %s19, 0
      %p86 = por %p84, %p85
      %s88 = sadd.s32 %s87, 1
      %p91 = scmp.eq.s32.totalorder %s13, 1
      %p92 = scmp.ne.s32.totalorder %s87, %s89
      %p93 = scmp.eq.s32.totalorder %s13, 0
      %p94 = por %p92, %p93
      %p95 = scmp.ne.s32.totalorder %s87, %s89
      %p96 = scmp.eq.s32.totalorder %s18, 1
      %p97 = por %p95, %p96
      %p98 = scmp.ne.s32.totalorder %s89, %s90
      %p99 = scmp.eq.s32.totalorder %s18, 0
      %p100 = por %p98, %p99
      %p101 = scmp.ne.s32.totalorder %s89, %s90
      %p102 = scmp.eq.s32.totalorder %s19, 1
      %p103 = por %p101, %p102
      %p105 = scmp.ne.s32.totalorder %s90, %s104
      %p106 = scmp.eq.s32.totalorder %s19, 0
      %p107 = por %p105, %p106
      %s108 = ssub.s32 %s21, %s28
      %p109 = scmp.eq.s32.totalorder %s108, 0
      %s111 = sadd.s32 %s110, 1
      %s112 = scalar_select %p109, %s110, %s111
      %p115 = pneg %p109
      %p116 = scmp.eq.s32.totalorder %s13, 1
      %p117 = por %p115, %p116
      %p118 = scmp.ne.s32.totalorder %s110, %s113
      %p119 = scmp.eq.s32.totalorder %s13, 0
      %p120 = por %p118, %p119
      %p121 = scmp.ne.s32.totalorder %s110, %s113
      %p122 = scmp.eq.s32.totalorder %s18, 1
      %p123 = por %p121, %p122
      %p124 = scmp.ne.s32.totalorder %s113, %s114
      %p125 = scmp.eq.s32.totalorder %s18, 0
      %p126 = por %p124, %p125
      %p127 = scmp.ne.s32.totalorder %s113, %s114
      %p128 = scmp.eq.s32.totalorder %s19, 1
      %p129 = por %p127, %p128
      %p131 = scmp.ne.s32.totalorder %s114, %s130
      %p132 = scmp.eq.s32.totalorder %s19, 0
      %p133 = por %p131, %p132
      %s134 = ssub.s32 %s20, %s32
      %s135 = ssub.s32 %s21, %s28
      %s136 = sor.u32 %s134, %s135
      %p137 = scmp.eq.s32.totalorder %s136, 0
      %s139 = sadd.s32 %s138, 1
      %s140 = scalar_select %p137, %s138, %s139
      %p143 = pneg %p137
      %p144 = scmp.eq.s32.totalorder %s13, 1
      %p145 = por %p143, %p144
      %p146 = scmp.ne.s32.totalorder %s138, %s141
      %p147 = scmp.eq.s32.totalorder %s13, 0
      %p148 = por %p146, %p147
      %p149 = scmp.ne.s32.totalorder %s138, %s141
      %p150 = scmp.eq.s32.totalorder %s18, 1
      %p151 = por %p149, %p150
      %p152 = scmp.ne.s32.totalorder %s141, %s142
      %p153 = scmp.eq.s32.totalorder %s18, 0
      %p154 = por %p152, %p153
      %p155 = scmp.ne.s32.totalorder %s141, %s142
      %p156 = scmp.eq.s32.totalorder %s19, 1
      %p157 = por %p155, %p156
      %p159 = scmp.ne.s32.totalorder %s142, %s158
      %p160 = scmp.eq.s32.totalorder %s19, 0
      %p161 = por %p159, %p160
      %p162 = scmp.le.s32.totalorder 1, %s13
      %p163 = scmp.lt.s32.totalorder %s13, 3
      %p164 = pnand %p162, %p163
      %p165 = pneg %p164
      // Predicated region
      $region9: #{tpu_custom_call.1} parent=5 // pred_check
        _
      $region10: #{tpu_custom_call.1} parent=5 // pred_check_branch
        %167 = sbr.rel (%p164) target = $region12
      $region11: #{tpu_custom_call.1} parent=5 // pred_region
        %s168 = ssub.s32 %s13, 1
        // Predicated region
        $region13: #{tpu_custom_call.1} parent=11 // pred_check
          %p169 = pneg %p79
        $region14: #{tpu_custom_call.1} parent=11 // pred_check_branch
          %171 = sbr.rel (%p169) target = $region16
        $region15: #{tpu_custom_call.1} parent=11 // pred_region
          %p172 = scmp.lt.s32.totalorder %s23, 0
          %s173 = scalar_select %p172, %s23, 0
          %s174 = smul.addr %s173, 8
          %s175 = scalar_lea.vmem %s1, %s174
        $region16: #{tpu_custom_call.1} parent=11 // pred_fallthru
          _
        // Predicated region
        $region17: #{tpu_custom_call.1} parent=11 // pred_check
          %p176 = pneg %p100
        $region18: #{tpu_custom_call.1} parent=11 // pred_check_branch
          %178 = sbr.rel (%p176) target = $region20
        $region19: #{tpu_custom_call.1} parent=11 // pred_region
          _
        $region20: #{tpu_custom_call.1} parent=11 // pred_fallthru
          _
        // Predicated region
        $region21: #{tpu_custom_call.1} parent=11 // pred_check
          %p179 = pneg %p126
        $region22: #{tpu_custom_call.1} parent=11 // pred_check_branch
          %181 = sbr.rel (%p179) target = $region24
        $region23: #{tpu_custom_call.1} parent=11 // pred_region
          %p182 = scmp.lt.s32.totalorder %s23, 0
          %s183 = scalar_select %p182, %s23, 0
          %s184 = smul.addr %s183, 8
          %s185 = scalar_lea.vmem %s3, %s184
        $region24: #{tpu_custom_call.1} parent=11 // pred_fallthru
          _
      $region12: #{tpu_custom_call.1} parent=5 // pred_fallthru
        _
      %p186 = scmp.lt.s32.totalorder %s13, 2
      // Predicated region
      $region25: #{tpu_custom_call.1} parent=5 // pred_check
        %p187 = pneg %p186
      $region26: #{tpu_custom_call.1} parent=5 // pred_check_branch
        %189 = sbr.rel (%p187) target = $region28
      $region27: #{tpu_custom_call.1} parent=5 // pred_region
        // Predicated region
        $region29: #{tpu_custom_call.1} parent=27 // pred_check
          %p190 = pneg %p47
        $region30: #{tpu_custom_call.1} parent=27 // pred_check_branch
          %192 = sbr.rel (%p190) target = $region32
        $region31: #{tpu_custom_call.1} parent=27 // pred_region
          %p193 = scmp.lt.s32.totalorder %s20, 1
          %s194 = scalar_select %p193, %s20, 1
          %p195 = scmp.lt.s32.totalorder %s21, 0
          %s196 = scalar_select %p195, %s21, 0
          %s197 = smul.addr %s194, 3
          %s198 = sadd.s32 %s196, %s197
          %s199 = smul.addr %s198, 8
          %s200 = scalar_lea.vmem %s0, %s199
        $region32: #{tpu_custom_call.1} parent=27 // pred_fallthru
          _
      $region28: #{tpu_custom_call.1} parent=5 // pred_fallthru
        _
      %p201 = scmp.le.s32.totalorder 1, %s13
      %p202 = scmp.lt.s32.totalorder %s13, 3
      %p203 = pnand %p201, %p202
      %p204 = pneg %p203
      // Predicated region
      $region33: #{tpu_custom_call.1} parent=5 // pred_check
        _
      $region34: #{tpu_custom_call.1} parent=5 // pred_check_branch
        %206 = sbr.rel (%p203) target = $region36
      $region35: #{tpu_custom_call.1} parent=5 // pred_region
        %s207 = ssub.s32 %s13, 1
        %p208 = scmp.lt.s32.totalorder %s22, 1
        %s209 = scalar_select %p208, %s22, 1
        %p210 = scmp.lt.s32.totalorder %s23, 0
        %s211 = scalar_select %p210, %s23, 0
        %s212 = smul.addr %s209, 3
        %s213 = sadd.s32 %s211, %s212
        %s214 = smul.addr %s213, 8
        %s215 = scalar_lea.vmem %s0, %s214
        %p216 = pneg %p53
        %p217 = pneg %p50
        %p218 = scmp.lt.s32.totalorder %s23, 0
        %s219 = scalar_select %p218, %s23, 0
        %s220 = smul.addr %s219, 8
        %s221 = scalar_lea.vmem %s1, %s220
        %p222 = pneg %p79
        %p223 = pneg %p76
        %p224 = pneg %p100
        %p225 = pneg %p97
        %p226 = scmp.lt.s32.totalorder %s23, 0
        %s227 = scalar_select %p226, %s23, 0
        %s228 = smul.addr %s227, 8
        %s229 = scalar_lea.vmem %s3, %s228
        %p230 = pneg %p126
        %p231 = pneg %p123
        %p232 = pneg %p154
        %p233 = pneg %p151
        %s234 = sand.u32 %s141, 1
        %s235 = scalar_lea.sflag [#allocation3], %s234
        %s236 = sand.u32 %s141, 1
        %s237 = smul.addr %s236, 8
        %s238 = scalar_lea.vmem [#allocation2], %s237
        %p239 = scmp.lt.s32.totalorder %s22, 1
        %s240 = scalar_select %p239, %s22, 1
        %p241 = scmp.lt.s32.totalorder %s23, 0
        %s242 = scalar_select %p241, %s23, 0
        %s243 = smul.addr %s240, 3
        %s244 = sadd.s32 %s242, %s243
        %s245 = smul.addr %s244, 8
        %s246 = scalar_lea.vmem %s0, %s245
        %p247 = scmp.lt.s32.totalorder %s23, 0
        %s248 = scalar_select %p247, %s23, 0
        %s249 = smul.addr %s248, 8
        %s250 = scalar_lea.vmem %s1, %s249
        %p251 = scmp.lt.s32.totalorder %s23, 0
        %s252 = scalar_select %p251, %s23, 0
        %s253 = smul.addr %s252, 8
        %s254 = scalar_lea.vmem %s3, %s253
        %v255 = vld [vmem:[%s246] sm:$0xff]
        %v256 = vld [vmem:[%s246 + $0x8] sm:$0xff]
        %v257 = vld [vmem:[%s246 + $0x10] sm:$0xff]
        %v258 = vld [vmem:[%s250] sm:$0xff]
        %v259 = vld [vmem:[%s250 + $0x8] sm:$0xff]
        %v260 = vld [vmem:[%s250 + $0x10] sm:$0xff]
        %v261 = vld [vmem:[%s2] sm:$0xff]
        %v262 = vlaneseq
        %v263 = vshrl.u32 %v262, 7
        %v264 = vsub.s32 0, %v263
        %v265 = vrot.slane %v258, %v264
        %v266 = vmul.f32 %v265, %v255
        %v267 = vlaneseq
        %v268 = vshrl.u32 %v267, 7
        %v269 = vsub.s32 4, %v268
        %v270 = vrot.slane %v258, %v269
        %v271 = vmul.f32 %v270, %v255
        %v273 = vrot.slane %v271, 4
        %v275 = vadd.f32 %v266, %v273
        %v276 = vlaneseq
        %v277 = vshrl.u32 %v276, 7
        %v278 = vsub.s32 0, %v277
        %v279 = vrot.slane %v259, %v278
        %v280 = vmul.f32 %v279, %v256
        %v281 = vadd.f32 %v275, %v280
        %v282 = vlaneseq
        %v283 = vshrl.u32 %v282, 7
        %v284 = vsub.s32 4, %v283
        %v285 = vrot.slane %v259, %v284
        %v286 = vmul.f32 %v285, %v256
        %v288 = vrot.slane %v286, 4
        %v290 = vadd.f32 %v281, %v288
        %v291 = vlaneseq
        %v292 = vshrl.u32 %v291, 7
        %v293 = vsub.s32 0, %v292
        %v294 = vrot.slane %v260, %v293
        %v295 = vmul.f32 %v294, %v257
        %v296 = vadd.f32 %v290, %v295
        %v297 = vlaneseq
        %v298 = vshrl.u32 %v297, 7
        %v299 = vsub.s32 4, %v298
        %v300 = vrot.slane %v260, %v299
        %v301 = vmul.f32 %v300, %v257
        %v303 = vrot.slane %v301, 4
        %v305 = vadd.f32 %v296, %v303
        %v306 = vlaneseq
        %v307 = vshrl.u32 %v306, 7
        %v308 = vsub.s32 1, %v307
        %v309 = vrot.slane %v258, %v308
        %v310 = vmul.f32 %v309, %v255
        %v311 = vlaneseq
        %v312 = vshrl.u32 %v311, 7
        %v313 = vsub.s32 5, %v312
        %v314 = vrot.slane %v258, %v313
        %v315 = vmul.f32 %v314, %v255
        %v317 = vrot.slane %v315, 4
        %v319 = vadd.f32 %v310, %v317
        %v320 = vlaneseq
        %v321 = vshrl.u32 %v320, 7
        %v322 = vsub.s32 1, %v321
        %v323 = vrot.slane %v259, %v322
        %v324 = vmul.f32 %v323, %v256
        %v325 = vadd.f32 %v319, %v324
        %v326 = vlaneseq
        %v327 = vshrl.u32 %v326, 7
        %v328 = vsub.s32 5, %v327
        %v329 = vrot.slane %v259, %v328
        %v330 = vmul.f32 %v329, %v256
        %v332 = vrot.slane %v330, 4
        %v334 = vadd.f32 %v325, %v332
        %v335 = vlaneseq
        %v336 = vshrl.u32 %v335, 7
        %v337 = vsub.s32 1, %v336
        %v338 = vrot.slane %v260, %v337
        %v339 = vmul.f32 %v338, %v257
        %v340 = vadd.f32 %v334, %v339
        %v341 = vlaneseq
        %v342 = vshrl.u32 %v341, 7
        %v343 = vsub.s32 5, %v342
        %v344 = vrot.slane %v260, %v343
        %v345 = vmul.f32 %v344, %v257
        %v347 = vrot.slane %v345, 4
        %v349 = vadd.f32 %v340, %v347
        %v350 = vlaneseq
        %v351 = vshrl.u32 %v350, 7
        %v352 = vsub.s32 2, %v351
        %v353 = vrot.slane %v258, %v352
        %v354 = vmul.f32 %v353, %v255
        %v355 = vlaneseq
        %v356 = vshrl.u32 %v355, 7
        %v357 = vsub.s32 6, %v356
        %v358 = vrot.slane %v258, %v357
        %v359 = vmul.f32 %v358, %v255
        %v361 = vrot.slane %v359, 4
        %v363 = vadd.f32 %v354, %v361
        %v364 = vlaneseq
        %v365 = vshrl.u32 %v364, 7
        %v366 = vsub.s32 2, %v365
        %v367 = vrot.slane %v259, %v366
        %v368 = vmul.f32 %v367, %v256
        %v369 = vadd.f32 %v363, %v368
        %v370 = vlaneseq
        %v371 = vshrl.u32 %v370, 7
        %v372 = vsub.s32 6, %v371
        %v373 = vrot.slane %v259, %v372
        %v374 = vmul.f32 %v373, %v256
        %v376 = vrot.slane %v374, 4
        %v378 = vadd.f32 %v369, %v376
        %v379 = vlaneseq
        %v380 = vshrl.u32 %v379, 7
        %v381 = vsub.s32 2, %v380
        %v382 = vrot.slane %v260, %v381
        %v383 = vmul.f32 %v382, %v257
        %v384 = vadd.f32 %v378, %v383
        %v385 = vlaneseq
        %v386 = vshrl.u32 %v385, 7
        %v387 = vsub.s32 6, %v386
        %v388 = vrot.slane %v260, %v387
        %v389 = vmul.f32 %v388, %v257
        %v391 = vrot.slane %v389, 4
        %v393 = vadd.f32 %v384, %v391
        %v394 = vlaneseq
        %v395 = vshrl.u32 %v394, 7
        %v396 = vsub.s32 3, %v395
        %v397 = vrot.slane %v258, %v396
        %v398 = vmul.f32 %v397, %v255
        %v399 = vlaneseq
        %v400 = vshrl.u32 %v399, 7
        %v401 = vsub.s32 7, %v400
        %v402 = vrot.slane %v258, %v401
        %v403 = vmul.f32 %v402, %v255
        %v405 = vrot.slane %v403, 4
        %v407 = vadd.f32 %v398, %v405
        %v408 = vlaneseq
        %v409 = vshrl.u32 %v408, 7
        %v410 = vsub.s32 3, %v409
        %v411 = vrot.slane %v259, %v410
        %v412 = vmul.f32 %v411, %v256
        %v413 = vadd.f32 %v407, %v412
        %v414 = vlaneseq
        %v415 = vshrl.u32 %v414, 7
        %v416 = vsub.s32 7, %v415
        %v417 = vrot.slane %v259, %v416
        %v418 = vmul.f32 %v417, %v256
        %v420 = vrot.slane %v418, 4
        %v422 = vadd.f32 %v413, %v420
        %v423 = vlaneseq
        %v424 = vshrl.u32 %v423, 7
        %v425 = vsub.s32 3, %v424
        %v426 = vrot.slane %v260, %v425
        %v427 = vmul.f32 %v426, %v257
        %v428 = vadd.f32 %v422, %v427
        %v429 = vlaneseq
        %v430 = vshrl.u32 %v429, 7
        %v431 = vsub.s32 7, %v430
        %v432 = vrot.slane %v260, %v431
        %v433 = vmul.f32 %v432, %v257
        %v435 = vrot.slane %v433, 4
        %v437 = vadd.f32 %v428, %v435
        %v439 = vrot.slane %v349, 4
        %v442 = vrot.slane %v437, 4
        %vm444 = vcmask 1043456
        %v445 = vsel %vm444, %v305, %v439
        %v446 = vsel %vm444, %v393, %v442
        %v447 = vld [vmem:[%s254] sm:$0xff]
        %vm448 = vcmask 130048
        %v450 = vsel %vm448, %v261, 0
        %452 = vmatprep.subr.mxu0 0.0
        %453 = vmatpush1.msra.mxu0 %v445
        %454 = vmatprep.subr.mxu0 0.0
        %455 = vmatpush1.msra.mxu0 %v446
        %456 = vmatprep.subr.mxu0 0.0
        %457 = vmatpush1.msra.mxu0 0.0
        %458 = vmatprep.subr.mxu0 0.0
        %459 = vmatpush1.msra.mxu0 0.0
        %460 = vmatprep.subr.mxu0 0.0
        %461 = vmatpush1.msra.mxu0 0.0
        %462 = vmatprep.subr.mxu0 0.0
        %463 = vmatpush1.msra.mxu0 0.0
        %464 = vmatprep.subr.mxu0 0.0
        %465 = vmatpush1.msra.mxu0 0.0
        %466 = vmatprep.subr.mxu0 0.0
        %467 = vmatpush1.msra.mxu0 0.0
        %468 = vmatprep.subr.mxu0 0.0
        %469 = vmatpush1.msra.mxu0 0.0
        %470 = vmatprep.subr.mxu0 0.0
        %471 = vmatpush1.msra.mxu0 0.0
        %472 = vmatprep.subr.mxu0 0.0
        %473 = vmatpush1.msra.mxu0 0.0
        %474 = vmatprep.subr.mxu0 0.0
        %475 = vmatpush1.msra.mxu0 0.0
        %476 = vmatprep.subr.mxu0 0.0
        %477 = vmatpush1.msra.mxu0 0.0
        %478 = vmatprep.subr.mxu0 0.0
        %479 = vmatpush1.msra.mxu0 0.0
        %480 = vmatprep.subr.mxu0 0.0
        %481 = vmatpush1.msra.mxu0 0.0
        %482 = vmatprep.subr.mxu0 0.0
        %483 = vmatpush1.msra.mxu0 0.0
        %484 = vmatprep.subr.mxu0 0.0
        %485 = vmatpush1.msra.mxu0 0.0
        %486 = vmatprep.subr.mxu0 0.0
        %487 = vmatpush1.msra.mxu0 0.0
        %488 = vmatprep.subr.mxu0 0.0
        %489 = vmatpush1.msra.mxu0 0.0
        %490 = vmatprep.subr.mxu0 0.0
        %491 = vmatpush1.msra.mxu0 0.0
        %492 = vmatprep.subr.mxu0 0.0
        %493 = vmatpush1.msra.mxu0 0.0
        %494 = vmatprep.subr.mxu0 0.0
        %495 = vmatpush1.msra.mxu0 0.0
        %496 = vmatprep.subr.mxu0 0.0
        %497 = vmatpush1.msra.mxu0 0.0
        %498 = vmatprep.subr.mxu0 0.0
        %499 = vmatpush1.msra.mxu0 0.0
        %500 = vmatprep.subr.mxu0 0.0
        %501 = vmatpush1.msra.mxu0 0.0
        %502 = vmatprep.subr.mxu0 0.0
        %503 = vmatpush1.msra.mxu0 0.0
        %504 = vmatprep.subr.mxu0 0.0
        %505 = vmatpush1.msra.mxu0 0.0
        %506 = vmatprep.subr.mxu0 0.0
        %507 = vmatpush1.msra.mxu0 0.0
        %508 = vmatprep.subr.mxu0 0.0
        %509 = vmatpush1.msra.mxu0 0.0
        %510 = vmatprep.subr.mxu0 0.0
        %511 = vmatpush1.msra.mxu0 0.0
        %512 = vmatprep.subr.mxu0 0.0
        %513 = vmatpush1.msra.mxu0 0.0
        %514 = vmatprep.subr.mxu0 0.0
        %515 = vmatpush1.msra.mxu0 0.0
        %516 = vmatprep.mubr.f32.mxu0 0.0
        %517 = vmatmul.mubr.f32.gmra.mrb[0].mxu0 %v450
        %v518 = vpop.f32.mrb[0].mxu0
        %v519 = vadd.f32 %v447, %v518
        %v520 = vpop.f32.mrb[0].mxu0
        %521 = vdwg.mxu0
        %vm522 = vcmp.gt.f32.partialorder %v519, 0.0
        %v523 = vmin.f32 %v519, 0.0
        %v524 = vmul.f32 %v523, 1.442695
        %v525 = vpow.pop %v524
        %v526 = vsub.f32 %v525, 1.0
        %v527 = vsel %vm522, %v519, %v526
        %528 = vst.msk [vmem:[%s238] sm:$0xff] %vm448, %v527
        %s529 = sand.u32 %s141, 1
        %s530 = scalar_lea.sflag [#allocation3], %s529
        %s531 = sand.u32 %s141, 1
        %s532 = smul.addr %s531, 8
        %s533 = scalar_lea.vmem [#allocation2], %s532
        // Predicated region
        $region37: #{tpu_custom_call.1} parent=35 // pred_check
          %p534 = pneg %p151
        $region38: #{tpu_custom_call.1} parent=35 // pred_check_branch
          %536 = sbr.rel (%p534) target = $region40
        $region39: #{tpu_custom_call.1} parent=35 // pred_region
          %s538 = ssub.s32 128, 128
          %539 = vsyncadd %s530, %s538
          %s540 = sadd.s32 %s23, %s22
          %s541 = smul.addr %s540, 128
          %s542 = scalar_lea.hbm %s4, %s541
          %s544 = sshll.u32 %s533, 4
          %s545 = int_to_ptr.vmem [resolvable:$true] %s544
          %547 = dma.vmem_to_hbm [thread:$0]  %s545, 128, %s542, %s530
        $region40: #{tpu_custom_call.1} parent=35 // pred_fallthru
          _
      $region36: #{tpu_custom_call.1} parent=5 // pred_fallthru
        _
      %p548 = scmp.le.s32.totalorder 2, %s13
      // Predicated region
      $region41: #{tpu_custom_call.1} parent=5 // pred_check
        %p549 = pneg %p548
      $region42: #{tpu_custom_call.1} parent=5 // pred_check_branch
        %551 = sbr.rel (%p549) target = $region44
      $region43: #{tpu_custom_call.1} parent=5 // pred_region
        %s552 = ssub.s32 %s13, 2
        // Predicated region
        $region45: #{tpu_custom_call.1} parent=43 // pred_check
          %p553 = pneg %p157
        $region46: #{tpu_custom_call.1} parent=43 // pred_check_branch
          %555 = sbr.rel (%p553) target = $region48
        $region47: #{tpu_custom_call.1} parent=43 // pred_region
          %s556 = sand.u32 %s142, 1
          %s557 = scalar_lea.sflag [#allocation3], %s556
          %s558 = sand.u32 %s142, 1
          %s559 = smul.addr %s558, 8
          %s560 = scalar_lea.vmem [#allocation2], %s559
          %561 = dma.done %s557, 128
        $region48: #{tpu_custom_call.1} parent=43 // pred_fallthru
          _
      $region44: #{tpu_custom_call.1} parent=5 // pred_fallthru
        _
    $region6: #{tpu_custom_call.1} parent=1 // loop_footer
      %s17 = sadd.s32 1, %s13
    $region7: #{tpu_custom_call.1} parent=1 // loop_footer_branch
      %12 = sbr.rel target = $region3
    $region8: #{tpu_custom_call.1} parent=1 // loop_exit
      _
    %562 = vsyncpa [#allocation3], 1
    %s563 = scalar_lea.sflag [#allocation3], 1
    %564 = vsyncpa %s563, 1

</llo_original>
